<compile_context>
chip_gen: v7x
topology: tpu7x:2x2x1
jax: 0.10.0
libtpu: 0.0.40
codegen_flags: <defaults>
</compile_context>

<pallas_src>
import functools

import jax
import jax.numpy as jnp
from jax.experimental import pallas as pl
from jax.experimental.pallas import tpu as pltpu

LANE = 128            # vreg lane width (minor dim)
MAX_TILE_ROWS = 2048  # up to 2048*128 elements (1 MiB f32) per input tile per step
NUM_CORE_SPLITS = 2   # leading "parallel" grid axis (uses both TCs on v7x)


def _round_up(x, m):
    return ((x + m - 1) // m) * m


def _soft_dice_kernel(x_ref, t_ref, out_ref, acc_ref, *,
                      n_valid, tile_rows, tiles_per_split, p):
    c = pl.program_id(0)   # core-split index ("parallel")
    j = pl.program_id(1)   # reduction step within the split ("arbitrary")

    @pl.when(j == 0)
    def _init():
        acc_ref[0] = 0.0   # partial sum(probs * labels)
        acc_ref[1] = 0.0   # partial sum(probs**p + labels**p)

    # Validity mask by flat element index: handles the (rare) lane padding of
    # the last row, the ragged last row-tile, and fully out-of-range tiles
    # produced by a ragged core split (their index_map is clamped).  Row/lane
    # comparisons avoid any int32 overflow on huge inputs.
    row_base = (c * tiles_per_split + j) * tile_rows
    full_rows = n_valid // LANE          # static Python ints
    rem = n_valid % LANE
    row_idx = row_base + jax.lax.broadcasted_iota(
        jnp.int32, (tile_rows, LANE), 0)
    if rem == 0:
        mask = row_idx < full_rows
    else:
        lane_idx = jax.lax.broadcasted_iota(jnp.int32, (tile_rows, LANE), 1)
        mask = (row_idx < full_rows) | ((row_idx == full_rows) & (lane_idx < rem))

    probs = jax.nn.sigmoid(x_ref[...].astype(jnp.float32))
    labels = t_ref[...].astype(jnp.float32)

    if p == 1:
        probs_p, labels_p = probs, labels
    elif p == 2:
        probs_p, labels_p = probs * probs, labels * labels
    else:
        probs_p, labels_p = probs ** p, labels ** p

    numer_tile = jnp.where(mask, probs * labels, 0.0)
    denor_tile = jnp.where(mask, probs_p + labels_p, 0.0)

    acc_ref[0] += jnp.sum(numer_tile)
    acc_ref[1] += jnp.sum(denor_tile)

    @pl.when(j == pl.num_programs(1) - 1)
    def _finalize():
        # Broadcast the per-split scalars into a lane-dense (8,128) block; the
        # wrapper reads element [0,0] of each.
        zeros = jnp.zeros((8, LANE), jnp.float32)
        out_ref[0, 0] = zeros + acc_ref[0]
        out_ref[0, 1] = zeros + acc_ref[1]


def soft_dice_loss(logits, labels, p=1, smooth=1.0):
    """Pallas TPU implementation of SoftDiceLossV1.forward (returns a scalar)."""
    x = logits.reshape(-1)       # keep native dtypes; cast to f32 in vregs
    t = labels.reshape(-1)
    n = x.shape[0]

    rows = pl.cdiv(n, LANE)
    pad = rows * LANE - n
    if pad:
        # Rare path (element count not a multiple of 128): pad with zeros; the
        # padded tail is masked inside the kernel so the fill value is moot.
        x = jnp.pad(x, (0, pad))
        t = jnp.pad(t, (0, pad))
    x2 = x.reshape(rows, LANE)
    t2 = t.reshape(rows, LANE)

    # Big, sublane-packing-friendly row tiles (multiple of 32 covers f32/bf16/int8).
    tile_rows = min(MAX_TILE_ROWS, _round_up(rows, 32))
    tiles = pl.cdiv(rows, tile_rows)
    splits = max(1, min(NUM_CORE_SPLITS, tiles))
    tiles_per_split = pl.cdiv(tiles, splits)
    max_tile = tiles - 1

    def in_map(c, j):
        # Clamp so over-provisioned tiles of a ragged core split stay in
        # bounds; their contribution is zeroed by the in-kernel mask.
        return (jnp.minimum(c * tiles_per_split + j, max_tile), 0)

    kernel = functools.partial(
        _soft_dice_kernel,
        n_valid=n, tile_rows=tile_rows, tiles_per_split=tiles_per_split, p=p)

    bytes_in = x2.size * x2.dtype.itemsize + t2.size * t2.dtype.itemsize
    partials = pl.pallas_call(
        kernel,
        out_shape=jax.ShapeDtypeStruct((splits, 2, 8, LANE), jnp.float32),
        grid_spec=pltpu.PrefetchScalarGridSpec(
            num_scalar_prefetch=0,
            grid=(splits, tiles_per_split),
            in_specs=[
                pl.BlockSpec((tile_rows, LANE), in_map),
                pl.BlockSpec((tile_rows, LANE), in_map),
            ],
            out_specs=pl.BlockSpec((1, 2, 8, LANE), lambda c, j: (c, 0, 0, 0)),
            scratch_shapes=[pltpu.SMEM((2,), jnp.float32)],
        ),
        compiler_params=pltpu.CompilerParams(
            dimension_semantics=("parallel", "arbitrary"),
        ),
        cost_estimate=pl.CostEstimate(
            flops=8 * n,
            transcendentals=n,
            bytes_accessed=bytes_in + splits * 2 * 8 * LANE * 4),
    )(x2, t2)

    numer = jnp.sum(partials[:, 0, 0, 0])
    denor = jnp.sum(partials[:, 1, 0, 0])
    smooth = jnp.float32(smooth)
    return 1.0 - (2.0 * numer + smooth) / (denor + smooth)


def _soft_dice_loss_ref(logits, labels, p=1, smooth=1.0):
    probs = jax.nn.sigmoid(logits.astype(jnp.float32)).reshape(-1)
    lab = labels.astype(jnp.float32).reshape(-1)
    numer = jnp.sum(probs * lab)
    denor = jnp.sum(probs ** p + lab ** p)
    return 1.0 - (2.0 * numer + smooth) / (denor + smooth)


if __name__ == "__main__":
    key = jax.random.PRNGKey(0)
    k1, k2, k3, k4 = jax.random.split(key, 4)

    # Case 1: (N, C, H, W)-style f32 logits and binary f32 labels.
    logits = jax.random.normal(k1, (2, 4, 16, 16), dtype=jnp.float32)
    labels = (jax.random.uniform(k2, (2, 4, 16, 16)) > 0.5).astype(jnp.float32)
    loss = soft_dice_loss(logits, labels, p=1, smooth=1.0)
    jax.block_until_ready(loss)
    ref = _soft_dice_loss_ref(logits, labels, p=1, smooth=1.0)
    assert jnp.allclose(loss, ref, atol=1e-5, rtol=1e-5), (loss, ref)

    # Case 2: non-lane-aligned element count (exercises the masked tail).
    logits2 = jax.random.normal(k3, (3, 5, 7), dtype=jnp.float32)
    labels2 = (jax.random.uniform(k4, (3, 5, 7)) > 0.5).astype(jnp.float32)
    loss2 = soft_dice_loss(logits2, labels2, p=1, smooth=1.0)
    jax.block_until_ready(loss2)
    ref2 = _soft_dice_loss_ref(logits2, labels2, p=1, smooth=1.0)
    assert jnp.allclose(loss2, ref2, atol=1e-5, rtol=1e-5), (loss2, ref2)

    # Case 3: native bf16 logits (halved HBM stream), f32 labels.
    logits3 = jax.random.normal(k1, (2, 4, 16, 32), dtype=jnp.bfloat16)
    labels3 = (jax.random.uniform(k2, (2, 4, 16, 32)) > 0.5).astype(jnp.float32)
    loss3 = soft_dice_loss(logits3, labels3, p=1, smooth=1.0)
    jax.block_until_ready(loss3)
    ref3 = _soft_dice_loss_ref(logits3, labels3, p=1, smooth=1.0)
    assert jnp.allclose(loss3, ref3, atol=1e-4, rtol=1e-4), (loss3, ref3)

    print("KERNEL_OK")
</pallas_src>

<mosaic_0001>
module attributes {stable_mosaic.version = 11 : i64} {
  func.func @_soft_dice_kernel(%arg0: i32, %arg1: i32, %arg2: memref<32x128xf32, #tpu.memory_space<vmem>>, %arg3: memref<32x128xf32, #tpu.memory_space<vmem>>, %arg4: memref<1x2x8x128xf32, #tpu.memory_space<vmem>>, %arg5: memref<2xf32, #tpu.memory_space<smem>>) attributes {dimension_semantics = [#tpu.dimension_semantics<parallel>, #tpu.dimension_semantics<arbitrary>], iteration_bounds = array<i64: 1, 1>, scalar_prefetch = 0 : i64, scratch_operands = 1 : i64, tpu.core_type = #tpu.core_type<tc>, window_params = [{transform_indices = @transform_0, window_bounds = array<i64: 32, 128>}, {transform_indices = @transform_1, window_bounds = array<i64: 32, 128>}, {transform_indices = @transform_2, window_bounds = array<i64: 1, 2, 8, 128>}]} {
    %c0_i32 = arith.constant 0 : i32
    %0 = arith.cmpi eq, %arg1, %c0_i32 : i32
    %1 = arith.extui %0 : i1 to i32
    %c0_i32_0 = arith.constant 0 : i32
    %2 = arith.cmpi ne, %1, %c0_i32_0 : i32
    scf.if %2 {
      %cst_13 = arith.constant 0.000000e+00 : f32
      %c0_14 = arith.constant 0 : index
      %41 = memref.load %arg5[%c0_14] : memref<2xf32, #tpu.memory_space<smem>>
      memref.store %cst_13, %arg5[%c0_14] : memref<2xf32, #tpu.memory_space<smem>>
      %cst_15 = arith.constant 0.000000e+00 : f32
      %c1_16 = arith.constant 1 : index
      %42 = memref.load %arg5[%c1_16] : memref<2xf32, #tpu.memory_space<smem>>
      memref.store %cst_15, %arg5[%c1_16] : memref<2xf32, #tpu.memory_space<smem>>
    } else {
    }
    %c1_i32 = arith.constant 1 : i32
    %3 = arith.muli %arg0, %c1_i32 : i32
    %4 = arith.addi %3, %arg1 : i32
    %c32_i32 = arith.constant 32 : i32
    %5 = arith.muli %4, %c32_i32 : i32
    %6 = tpu.iota {dimensions = array<i32: 0>} : vector<32x128xi32>
    %7 = vector.broadcast %5 : i32 to vector<32x128xi32>
    %8 = arith.addi %7, %6 : vector<32x128xi32>
    %c16_i32 = arith.constant 16 : i32
    %9 = vector.broadcast %c16_i32 : i32 to vector<32x128xi32>
    %10 = arith.cmpi slt, %8, %9 : vector<32x128xi32>
    %c0 = arith.constant 0 : index
    %c0_1 = arith.constant 0 : index
    %11 = vector.load %arg2[%c0, %c0_1] : memref<32x128xf32, #tpu.memory_space<vmem>>, vector<32x128xf32>
    %12 = arith.negf %11 : vector<32x128xf32>
    %13 = math.exp %12 : vector<32x128xf32>
    %cst = arith.constant 1.000000e+00 : f32
    %14 = vector.broadcast %cst : f32 to vector<32x128xf32>
    %15 = arith.addf %14, %13 : vector<32x128xf32>
    %16 = arith.divf %14, %15 : vector<32x128xf32>
    %c0_2 = arith.constant 0 : index
    %c0_3 = arith.constant 0 : index
    %17 = vector.load %arg3[%c0_2, %c0_3] : memref<32x128xf32, #tpu.memory_space<vmem>>, vector<32x128xf32>
    %18 = arith.mulf %16, %17 : vector<32x128xf32>
    %cst_4 = arith.constant 0.000000e+00 : f32
    %19 = vector.broadcast %cst_4 : f32 to vector<32x128xf32>
    %20 = arith.select %10, %18, %19 : vector<32x128xi1>, vector<32x128xf32>
    %21 = arith.addf %16, %17 : vector<32x128xf32>
    %cst_5 = arith.constant 0.000000e+00 : f32
    %22 = vector.broadcast %cst_5 : f32 to vector<32x128xf32>
    %23 = arith.select %10, %21, %22 : vector<32x128xi1>, vector<32x128xf32>
    %c0_6 = arith.constant 0 : index
    %24 = memref.load %arg5[%c0_6] : memref<2xf32, #tpu.memory_space<smem>>
    %25 = vector.shape_cast %20 : vector<32x128xf32> to vector<1x32x128xf32>
    %cst_7 = arith.constant dense<0.000000e+00> : vector<1xf32>
    %26 = vector.multi_reduction <add>, %25, %cst_7 [1, 2] : vector<1x32x128xf32> to vector<1xf32>
    %27 = vector.shape_cast %26 : vector<1xf32> to vector<1x1x1xf32>
    %28 = vector.extract %27[0, 0, 0] : f32 from vector<1x1x1xf32>
    %29 = arith.addf %24, %28 : f32
    %c0_8 = arith.constant 0 : index
    %30 = memref.load %arg5[%c0_8] : memref<2xf32, #tpu.memory_space<smem>>
    memref.store %29, %arg5[%c0_8] : memref<2xf32, #tpu.memory_space<smem>>
    %c1 = arith.constant 1 : index
    %31 = memref.load %arg5[%c1] : memref<2xf32, #tpu.memory_space<smem>>
    %32 = vector.shape_cast %23 : vector<32x128xf32> to vector<1x32x128xf32>
    %cst_9 = arith.constant dense<0.000000e+00> : vector<1xf32>
    %33 = vector.multi_reduction <add>, %32, %cst_9 [1, 2] : vector<1x32x128xf32> to vector<1xf32>
    %34 = vector.shape_cast %33 : vector<1xf32> to vector<1x1x1xf32>
    %35 = vector.extract %34[0, 0, 0] : f32 from vector<1x1x1xf32>
    %36 = arith.addf %31, %35 : f32
    %c1_10 = arith.constant 1 : index
    %37 = memref.load %arg5[%c1_10] : memref<2xf32, #tpu.memory_space<smem>>
    memref.store %36, %arg5[%c1_10] : memref<2xf32, #tpu.memory_space<smem>>
    %c0_i32_11 = arith.constant 0 : i32
    %38 = arith.cmpi eq, %arg1, %c0_i32_11 : i32
    %39 = arith.extui %38 : i1 to i32
    %c0_i32_12 = arith.constant 0 : i32
    %40 = arith.cmpi ne, %39, %c0_i32_12 : i32
    scf.if %40 {
      %cst_13 = arith.constant 0.000000e+00 : f32
      %41 = vector.broadcast %cst_13 : f32 to vector<8x128xf32>
      %c0_14 = arith.constant 0 : index
      %42 = memref.load %arg5[%c0_14] : memref<2xf32, #tpu.memory_space<smem>>
      %43 = vector.broadcast %42 : f32 to vector<8x128xf32>
      %44 = arith.addf %41, %43 : vector<8x128xf32>
      %c0_15 = arith.constant 0 : index
      %c0_16 = arith.constant 0 : index
      %c0_17 = arith.constant 0 : index
      %c0_18 = arith.constant 0 : index
      %45 = vector.load %arg4[%c0_15, %c0_16, %c0_17, %c0_18] : memref<1x2x8x128xf32, #tpu.memory_space<vmem>>, vector<1x1x8x128xf32>
      %46 = vector.shape_cast %45 : vector<1x1x8x128xf32> to vector<8x128xf32>
      %47 = vector.shape_cast %44 : vector<8x128xf32> to vector<1x1x8x128xf32>
      tpu.vector_store %arg4[%c0_15, %c0_16, %c0_17, %c0_18], %47 {strides = array<i32>} : memref<1x2x8x128xf32, #tpu.memory_space<vmem>>, vector<1x1x8x128xf32>,
      %c1_19 = arith.constant 1 : index
      %48 = memref.load %arg5[%c1_19] : memref<2xf32, #tpu.memory_space<smem>>
      %49 = vector.broadcast %48 : f32 to vector<8x128xf32>
      %50 = arith.addf %41, %49 : vector<8x128xf32>
      %c0_20 = arith.constant 0 : index
      %c1_21 = arith.constant 1 : index
      %c0_22 = arith.constant 0 : index
      %c0_23 = arith.constant 0 : index
      %51 = vector.load %arg4[%c0_20, %c1_21, %c0_22, %c0_23] : memref<1x2x8x128xf32, #tpu.memory_space<vmem>>, vector<1x1x8x128xf32>
      %52 = vector.shape_cast %51 : vector<1x1x8x128xf32> to vector<8x128xf32>
      %53 = vector.shape_cast %50 : vector<8x128xf32> to vector<1x1x8x128xf32>
      tpu.vector_store %arg4[%c0_20, %c1_21, %c0_22, %c0_23], %53 {strides = array<i32>} : memref<1x2x8x128xf32, #tpu.memory_space<vmem>>, vector<1x1x8x128xf32>,
    } else {
    }
    return
  }
  func.func @transform_0(%arg0: i32, %arg1: i32) -> (i32, i32) {
    %c1_i32 = arith.constant 1 : i32
    %0 = arith.muli %arg0, %c1_i32 : i32
    %1 = arith.addi %0, %arg1 : i32
    %c0_i32 = arith.constant 0 : i32
    %2 = arith.minsi %1, %c0_i32 : i32
    %c0_i32_0 = arith.constant 0 : i32
    %c0_i32_1 = arith.constant 0 : i32
    return %2, %c0_i32_0 : i32, i32
  }
  func.func @transform_1(%arg0: i32, %arg1: i32) -> (i32, i32) {
    %c1_i32 = arith.constant 1 : i32
    %0 = arith.muli %arg0, %c1_i32 : i32
    %1 = arith.addi %0, %arg1 : i32
    %c0_i32 = arith.constant 0 : i32
    %2 = arith.minsi %1, %c0_i32 : i32
    %c0_i32_0 = arith.constant 0 : i32
    %c0_i32_1 = arith.constant 0 : i32
    return %2, %c0_i32_0 : i32, i32
  }
  func.func @transform_2(%arg0: i32, %arg1: i32) -> (i32, i32, i32, i32) {
    %c0_i32 = arith.constant 0 : i32
    %c0_i32_0 = arith.constant 0 : i32
    %c0_i32_1 = arith.constant 0 : i32
    %c0_i32_2 = arith.constant 0 : i32
    return %arg0, %c0_i32, %c0_i32_0, %c0_i32_1 : i32, i32, i32, i32
  }
}

</mosaic_0001>

<llo_original>
// kernel: tpu_custom_call.1
$region0: #{tpu_custom_call.1}
  #allocation0 [shape = 'u32[]', space=smem, size = 0x4, offset = 0x4, fixed_abs, tag = 'smem constant byte address 0x4 - core index']
  #allocation1 [shape = 'u32[144,128]{1,0:T(1,128)}', space=vmem, size = 0x12000, scoped, tag = 'internal scratch']
  #allocation2 [shape = 'f32[2]{0:T(128)}', space=smem, size = 0x200, scoped, tag = 'scratch operand']
  %s0 = inlined_call_operand.hbm [shape: f32[16,128], index: 0, kind: input, shape index: {}]
  %s1 = inlined_call_operand.hbm [shape: f32[16,128], index: 1, kind: input, shape index: {}]
  %s2 = inlined_call_operand.hbm [shape: f32[1,2,8,128], index: 2, kind: output, shape index: {}]
  %s3 = sld [smem:[#allocation0]]
  $region34: #{tpu_custom_call.1} parent=0
    _
  %s5 = ssub.s32 1, %s3
  %s6 = scalar_select 0, %s5, %s3
  $region1: #{tpu_custom_call.1} parent=0
    #allocation3 [shape = 'u8[16384]{0}', space=vmem, size = 0x4000, scoped, tag = 'input window, operand 0, single buffered']
    #allocation4 [shape = 's32[1]{0}', space=sflag, size = 0x4, scoped, tag = 'scoped memory for tpu_custom_call.1']
    #allocation5 [shape = 's32[1]{0}', space=sflag, size = 0x4, scoped, tag = 'scoped memory for tpu_custom_call.1']
    #allocation6 [shape = 'u8[16384]{0}', space=vmem, size = 0x4000, scoped, tag = 'input window, operand 1, single buffered']
    #allocation7 [shape = 's32[1]{0}', space=sflag, size = 0x4, scoped, tag = 'scoped memory for tpu_custom_call.1']
    #allocation8 [shape = 'u8[8192]{0}', space=vmem, size = 0x2000, scoped, tag = 'output window, operand 0, single buffered']
    %7 = vsyncpa [#allocation4], 0
    %8 = vsyncpa [#allocation7], 0
    %9 = vsyncpa [#allocation5], 0
    // Predicated region
    $region2: #{tpu_custom_call.1} parent=1 // pred_check
      _
    $region3: #{tpu_custom_call.1} parent=1 // pred_check_branch
      %11 = sbr.rel (0) target = $region5
    $region4: #{tpu_custom_call.1} parent=1 // pred_region
      %s12 = sadd.s32 0, 0
      %p13 = scmp.lt.s32.totalorder %s12, 0
      %s14 = scalar_select %p13, %s12, 0
      %s15 = smul.u32 4, %s14
      %s16 = ssub.s32 2, %s15
      %s17 = smul.u32 128, %s16
      %s19 = ssub.s32 512, %s17
      %20 = vsyncadd [#allocation4], %s19
      %p21 = scmp.ne.s32.totalorder 0, %s17
      %s22 = smul.addr %s15, 128
      %s23 = scalar_lea.hbm %s0, %s22
      %s24 = smul.u32 8, %s16
      %s25 = sshll.u32 [#allocation3], 4
      %s26 = int_to_ptr.vmem [resolvable:$true] %s25
      %s27 = sshll.u32 %s24, 4
      %31 = dma.hbm_to_vmem [thread:$0]  (%p21), %s23, %s27, %s26, [#allocation4], 128, 128, 8
    $region5: #{tpu_custom_call.1} parent=1 // pred_fallthru
      _
    // Predicated region
    $region6: #{tpu_custom_call.1} parent=1 // pred_check
      _
    $region7: #{tpu_custom_call.1} parent=1 // pred_check_branch
      %33 = sbr.rel (0) target = $region9
    $region8: #{tpu_custom_call.1} parent=1 // pred_region
      %s34 = sadd.s32 0, 0
      %p35 = scmp.lt.s32.totalorder %s34, 0
      %s36 = scalar_select %p35, %s34, 0
      %s37 = smul.u32 4, %s36
      %s38 = ssub.s32 2, %s37
      %s39 = smul.u32 128, %s38
      %s41 = ssub.s32 512, %s39
      %42 = vsyncadd [#allocation7], %s41
      %p43 = scmp.ne.s32.totalorder 0, %s39
      %s44 = smul.addr %s37, 128
      %s45 = scalar_lea.hbm %s1, %s44
      %s46 = smul.u32 8, %s38
      %s47 = sshll.u32 [#allocation6], 4
      %s48 = int_to_ptr.vmem [resolvable:$true] %s47
      %s49 = sshll.u32 %s46, 4
      %53 = dma.hbm_to_vmem [thread:$0]  (%p43), %s45, %s49, %s48, [#allocation7], 128, 128, 8
    $region9: #{tpu_custom_call.1} parent=1 // pred_fallthru
      _
    // Predicated region
    $region10: #{tpu_custom_call.1} parent=1 // pred_check
      _
    $region11: #{tpu_custom_call.1} parent=1 // pred_check_branch
      %55 = sbr.rel (0) target = $region13
    $region12: #{tpu_custom_call.1} parent=1 // pred_region
      %56 = dma.done [#allocation4], 512
    $region13: #{tpu_custom_call.1} parent=1 // pred_fallthru
      _
    // Predicated region
    $region14: #{tpu_custom_call.1} parent=1 // pred_check
      _
    $region15: #{tpu_custom_call.1} parent=1 // pred_check_branch
      %58 = sbr.rel (0) target = $region17
    $region16: #{tpu_custom_call.1} parent=1 // pred_region
      %59 = dma.done [#allocation7], 512
    $region17: #{tpu_custom_call.1} parent=1 // pred_fallthru
      _
    %s60 = sadd.s32 0, 0
    %p61 = scmp.lt.s32.totalorder %s60, 0
    %s62 = scalar_select %p61, %s60, 0
    %s63 = smul.u32 4, %s62
    %s64 = ssub.s32 2, %s63
    %s65 = smul.u32 128, %s64
    %s66 = sadd.s32 0, 0
    %p67 = scmp.lt.s32.totalorder %s66, 0
    %s68 = scalar_select %p67, %s66, 0
    %s69 = smul.u32 4, %s68
    %s70 = ssub.s32 2, %s69
    %s71 = smul.u32 128, %s70
    %p72 = scmp.eq.s32.totalorder 0, 0
    // Predicated region
    $region18: #{tpu_custom_call.1} parent=1 // pred_check
      %p73 = pneg %p72
    $region19: #{tpu_custom_call.1} parent=1 // pred_check_branch
      %75 = sbr.rel (%p73) target = $region21
    $region20: #{tpu_custom_call.1} parent=1 // pred_region
      %s76 = scalar_lea.smem [#allocation2], 0
      %77 = sst [smem:[%s76]] 0.0
      %s78 = scalar_lea.smem [#allocation2], 1
      %79 = sst [smem:[%s78]] 0.0
    $region21: #{tpu_custom_call.1} parent=1 // pred_fallthru
      _
    %s80 = sadd.s32 0, 0
    %s81 = smul.u32 %s80, 32
    %v82 = vlaneseq
    %v83 = vshrl.u32 %v82, 7
    %v84 = vadd.s32 %v83, 8
    %v85 = vadd.s32 %v83, 16
    %v86 = vadd.s32 %v83, 24
    %v87 = vstv %s81
    %v88 = vadd.s32 %v87, %v83
    %v89 = vadd.s32 %v87, %v84
    %v90 = vadd.s32 %v87, %v85
    %v91 = vadd.s32 %v87, %v86
    %vm92 = vcmp.lt.s32.totalorder %v88, 16
    %vm93 = vcmp.lt.s32.totalorder %v89, 16
    %vm94 = vcmp.lt.s32.totalorder %v90, 16
    %vm95 = vcmp.lt.s32.totalorder %v91, 16
    %v96 = vld [vmem:[#allocation3] sm:$0xff]
    %v97 = vld [vmem:[#allocation3 + $0x8] sm:$0xff]
    %v98 = vld [vmem:[#allocation3 + $0x10] sm:$0xff]
    %v99 = vld [vmem:[#allocation3 + $0x18] sm:$0xff]
    %v100 = vxor.u32 %v96, 2147483648
    %v101 = vxor.u32 %v97, 2147483648
    %v102 = vxor.u32 %v98, 2147483648
    %v103 = vxor.u32 %v99, 2147483648
    %v104 = vmul.f32 %v100, 1.442695
    %v105 = vpow.pop %v104
    %v106 = vmul.f32 %v101, 1.442695
    %v107 = vpow.pop %v106
    %v108 = vmul.f32 %v102, 1.442695
    %v109 = vpow.pop %v108
    %v110 = vmul.f32 %v103, 1.442695
    %v111 = vpow.pop %v110
    %v112 = vadd.f32 %v105, 1.0
    %v113 = vadd.f32 %v107, 1.0
    %v114 = vadd.f32 %v109, 1.0
    %v115 = vadd.f32 %v111, 1.0
    %v116 = vrcp.pop %v112
    %v117 = vmul.f32 1.0, %v116
    %v118 = vrcp.pop %v113
    %v119 = vmul.f32 1.0, %v118
    %v120 = vrcp.pop %v114
    %v121 = vmul.f32 1.0, %v120
    %v122 = vrcp.pop %v115
    %v123 = vmul.f32 1.0, %v122
    %v124 = vld [vmem:[#allocation6] sm:$0xff]
    %v125 = vld [vmem:[#allocation6 + $0x8] sm:$0xff]
    %v126 = vld [vmem:[#allocation6 + $0x10] sm:$0xff]
    %v127 = vld [vmem:[#allocation6 + $0x18] sm:$0xff]
    %v128 = vmul.f32 %v117, %v124
    %v129 = vmul.f32 %v119, %v125
    %v130 = vmul.f32 %v121, %v126
    %v131 = vmul.f32 %v123, %v127
    %v132 = vsel %vm92, %v128, 0.0
    %v133 = vsel %vm93, %v129, 0.0
    %v134 = vsel %vm94, %v130, 0.0
    %v135 = vsel %vm95, %v131, 0.0
    %v136 = vadd.f32 %v117, %v124
    %v137 = vadd.f32 %v119, %v125
    %v138 = vadd.f32 %v121, %v126
    %v139 = vadd.f32 %v123, %v127
    %v140 = vsel %vm92, %v136, 0.0
    %v141 = vsel %vm93, %v137, 0.0
    %v142 = vsel %vm94, %v138, 0.0
    %v143 = vsel %vm95, %v139, 0.0
    %s144 = sld [smem:[#allocation2]]
    %v145 = vadd.f32 %v132, %v133
    %v146 = vadd.f32 %v145, %v134
    %v147 = vadd.f32 %v146, %v135
    %148 = vadd.xlane.f32.xlu0 %v147
    %v149 = vpop.xlane.xlu0 %148
    %v150 = vrot.slane %v149, 4
    %v151 = vadd.f32 %v149, %v150
    %v152 = vrot.slane %v151, 2
    %v153 = vadd.f32 %v151, %v152
    %v154 = vrot.slane %v153, 1
    %v155 = vadd.f32 %v153, %v154
    %s156 = vtos %v155
    %s157 = sadd.f32 %s144, %s156
    %s158 = scalar_lea.smem [#allocation2], 0
    %159 = sst [smem:[%s158]] %s157
    %s160 = sld [smem:[#allocation2 + $0x1]]
    %v161 = vadd.f32 %v140, %v141
    %v162 = vadd.f32 %v161, %v142
    %v163 = vadd.f32 %v162, %v143
    %164 = vadd.xlane.f32.xlu0 %v163
    %v165 = vpop.xlane.xlu0 %164
    %v166 = vrot.slane %v165, 4
    %v167 = vadd.f32 %v165, %v166
    %v168 = vrot.slane %v167, 2
    %v169 = vadd.f32 %v167, %v168
    %v170 = vrot.slane %v169, 1
    %v171 = vadd.f32 %v169, %v170
    %s172 = vtos %v171
    %s173 = sadd.f32 %s160, %s172
    %s174 = scalar_lea.smem [#allocation2], 1
    %175 = sst [smem:[%s174]] %s173
    // Predicated region
    $region22: #{tpu_custom_call.1} parent=1 // pred_check
      %p176 = pneg %p72
    $region23: #{tpu_custom_call.1} parent=1 // pred_check_branch
      %178 = sbr.rel (%p176) target = $region25
    $region24: #{tpu_custom_call.1} parent=1 // pred_region
      %s179 = sld [smem:[#allocation2]]
      %v180 = vstv %s179
      %v181 = vadd.f32 %v180, 0.0
      %182 = vst [vmem:[#allocation8] sm:$0xff] %v181
      %s183 = sld [smem:[#allocation2 + $0x1]]
      %v184 = vstv %s183
      %v185 = vadd.f32 %v184, 0.0
      %s186 = scalar_lea.vmem [#allocation8], 8
      %187 = vst [vmem:[%s186] sm:$0xff] %v185
    $region25: #{tpu_custom_call.1} parent=1 // pred_fallthru
      _
    // Predicated region
    $region26: #{tpu_custom_call.1} parent=1 // pred_check
      _
    $region27: #{tpu_custom_call.1} parent=1 // pred_check_branch
      %189 = sbr.rel (0) target = $region29
    $region28: #{tpu_custom_call.1} parent=1 // pred_region
      %s191 = ssub.s32 256, 256
      %192 = vsyncadd [#allocation5], %s191
      %s193 = sshll.u32 [#allocation8], 4
      %s194 = int_to_ptr.vmem [resolvable:$true] %s193
      %199 = dma.vmem_to_hbm [thread:$0]  %s194, 256, %s2, [#allocation5], 128, 128, 8
    $region29: #{tpu_custom_call.1} parent=1 // pred_fallthru
      _
    // Predicated region
    $region30: #{tpu_custom_call.1} parent=1 // pred_check
      _
    $region31: #{tpu_custom_call.1} parent=1 // pred_check_branch
      %201 = sbr.rel (0) target = $region33
    $region32: #{tpu_custom_call.1} parent=1 // pred_region
      %202 = dma.done [#allocation5], 256
    $region33: #{tpu_custom_call.1} parent=1 // pred_fallthru
      _
    %203 = vsyncpa [#allocation4], 1
    %204 = vsyncpa [#allocation7], 1
    %205 = vsyncpa [#allocation5], 1

</llo_original>
